<compile_context>
chip_gen: v7x
topology: tpu7x:2x2x1
jax: 0.10.0
libtpu: 0.0.40
codegen_flags: <defaults>
</compile_context>

<pallas_src>
import functools

import jax
import jax.numpy as jnp
from jax.experimental import pallas as pl
from jax.experimental.pallas import tpu as pltpu


def _round_up(n: int, m: int) -> int:
    return ((n + m - 1) // m) * m


def _cdiv(a: int, b: int) -> int:
    return (a + b - 1) // b


def _sublane(itemsize: int) -> int:
    return {4: 8, 2: 16, 1: 32}.get(itemsize, 8)


def _gen_params():
    """(per-tile byte target, vmem_limit_bytes) tuned per TPU generation."""
    try:
        kind = jax.devices()[0].device_kind.lower()
    except Exception:  # defensive: never fail on device query
        kind = ""
    if "v7" in kind:
        # v7x: ~3.2 TB/s HBM -> larger tiles amortize the ~0.35 us/step
        # overhead; 2 in + 2 out buffers at 8 MiB = 32 MiB << 64 MiB VMEM.
        return 8 * 1024 * 1024, 48 * 1024 * 1024
    # v5e / v6e: 4 MiB tiles already sit on the HBM roofline plateau; the
    # 32 MiB limit is above v5e's 16 MiB default scoped VMEM and fits all gens.
    return 4 * 1024 * 1024, 32 * 1024 * 1024


def _min_row_blocks(out_bytes: int, rows: int, sub: int) -> int:
    if out_bytes >= 4 * 1024 * 1024:
        return 8          # deep pipeline + megacore sharding on v7x
    if rows >= 2 * sub:
        return 2          # at least overlap prefetch / writeback
    return 1


def _copy_kernel(x_ref, o_ref):
    # The BlockSpec already selected the strided rows / wanted columns.
    o_ref[...] = x_ref[...]


def _group_subselect_kernel(x_ref, o_ref, *, stride, tile_i):
    # x_ref holds `tile_i` contiguous groups of `stride` sequence rows; keep
    # row 0 of each group (strided sublane read inside VMEM).
    o_ref[...] = x_ref[pl.ds(0, tile_i, stride=stride), :]


def _shrink_strided_view(x: jax.Array, stride: int) -> jax.Array:
    """Divisible, wide-C path: free group view + strided-row DMAs (optimal traffic)."""
    B, L, C = x.shape                     # pre: L % stride == 0, C >= 128
    L_out = L // stride
    rows, group = B * L_out, stride * C
    x2 = x.reshape(rows, group)           # free row-major reinterpretation
    itemsize = jnp.dtype(x.dtype).itemsize
    sub = _sublane(itemsize)
    target, vmem_limit = _gen_params()

    # Lane tile: multiple of 128, prefer the full C width (long unmasked
    # stores, effectively 1-D grid); split C only if a minimal row slab of the
    # full width would not fit the per-tile byte budget.
    max_tile_c = max(128, (target // (sub * itemsize)) // 128 * 128)
    tile_c = min(C if C % 128 == 0 else (C // 128) * 128, max_tile_c)

    # Row tile: ~`target` bytes per tile, but enough row blocks for pipelining
    # and megacore sharding; never larger than the array itself.
    out_bytes = rows * C * itemsize
    min_blocks = _min_row_blocks(out_bytes, rows, sub)
    rows_by_target = max(sub, (target // (tile_c * itemsize)) // sub * sub)
    rows_by_blocks = max(sub, _round_up(_cdiv(rows, min_blocks), sub))
    tile_r = min(rows_by_target, rows_by_blocks)
    if tile_r > rows:
        tile_r = rows                      # full-extent block (legal, no overhang)

    grid = (_cdiv(rows, tile_r), _cdiv(C, tile_c))
    out2 = pl.pallas_call(
        _copy_kernel,
        out_shape=jax.ShapeDtypeStruct((rows, C), x.dtype),
        grid=grid,
        # Input: rows of the (rows, stride*C) group view; the grid only visits
        # the first C columns of each group (the wanted elements).
        in_specs=[pl.BlockSpec((tile_r, tile_c), lambda i, j: (i, j))],
        out_specs=pl.BlockSpec((tile_r, tile_c), lambda i, j: (i, j)),
        compiler_params=pltpu.CompilerParams(
            dimension_semantics=("parallel", "parallel"),
            vmem_limit_bytes=vmem_limit),
        cost_estimate=pl.CostEstimate(
            flops=0, transcendentals=0,
            bytes_accessed=2 * rows * C * itemsize),
    )(x2)
    return out2.reshape(B, L_out, C)


def _shrink_group_read(x: jax.Array, stride: int) -> jax.Array:
    """Ragged / small-C path: contiguous group reads, in-VMEM strided subselect.

    Works for any L and stride with zero padding and zero extra HBM round trips.
    """
    B, L, C = x.shape
    L_out = (L - 1) // stride + 1
    itemsize = jnp.dtype(x.dtype).itemsize
    sub = _sublane(itemsize)
    target, vmem_limit = _gen_params()

    # Lane tile: full C whenever it fits the budget (both arrays share the last
    # dim C, so a full-extent lane block is legal even when C % 128 != 0).
    max_tile_c = max(128, (target // (sub * stride * itemsize)) // 128 * 128)
    if C % 128 == 0:
        tile_c = min(C, max_tile_c)
    elif C <= max_tile_c:
        tile_c = C
    else:
        tile_c = (C // 128) * 128

    out_bytes = B * L_out * C * itemsize
    min_blocks = _min_row_blocks(out_bytes, B * L_out, sub)
    n_row_tiles_min = _cdiv(min_blocks, B)          # batch axis already parallel
    rows_by_target = max(sub, (target // (tile_c * stride * itemsize)) // sub * sub)
    rows_by_blocks = max(sub, _round_up(_cdiv(L_out, n_row_tiles_min), sub))
    # Largest sublane-aligned output-row tile whose input block stays within L.
    max_fit = (L // (stride * sub)) * sub
    if max_fit == 0:
        tile_i, in_rows = L_out, L                  # one full-extent row block / batch
    else:
        tile_i = min(rows_by_target, rows_by_blocks, max_fit)
        in_rows = tile_i * stride

    grid = (B, _cdiv(L_out, tile_i), _cdiv(C, tile_c))
    kernel = functools.partial(_group_subselect_kernel, stride=stride, tile_i=tile_i)
    return pl.pallas_call(
        kernel,
        out_shape=jax.ShapeDtypeStruct((B, L_out, C), x.dtype),
        grid=grid,
        in_specs=[pl.BlockSpec((None, in_rows, tile_c), lambda b, i, j: (b, i, j))],
        out_specs=pl.BlockSpec((None, tile_i, tile_c), lambda b, i, j: (b, i, j)),
        compiler_params=pltpu.CompilerParams(
            dimension_semantics=("parallel", "parallel", "parallel"),
            vmem_limit_bytes=vmem_limit),
        cost_estimate=pl.CostEstimate(
            flops=0, transcendentals=0,
            bytes_accessed=(B * L + B * L_out) * C * itemsize),
    )(x)


def shrink_forward(x: jax.Array, stride: int) -> jax.Array:
    """Pallas equivalent of Shrink.forward: y[b, i, c] = x[b, i*stride, c]."""
    if stride < 1:
        raise ValueError(f"stride must be >= 1, got {stride}")
    B, L, C = x.shape
    if stride == 1:
        return x                                   # AvgPool1d(1, 1, 0) is identity
    itemsize = jnp.dtype(x.dtype).itemsize
    use_group_read = (
        (L % stride != 0)                          # ragged tail: avoid any pad/copy
        or (C < 128)                               # lane tile would exceed the group
        or (C * itemsize < 512 and stride <= 4)    # short strided bursts: read groups whole
    )
    if use_group_read:
        return _shrink_group_read(x, stride)
    return _shrink_strided_view(x, stride)


def _reference(x: jax.Array, stride: int) -> jax.Array:
    # AvgPool1d(kernel=1, stride, pad=0) over the transposed tensor is exactly
    # a strided subsample along the sequence dimension.
    return x[:, ::stride, :]


if __name__ == "__main__":
    key = jax.random.PRNGKey(0)

    # Small shape consistent with the ViT token stream this module consumes:
    # batch=2, seq=16, hidden=128.
    B, L, C = 2, 16, 128
    x = jax.random.normal(key, (B, L, C), dtype=jnp.float32)

    # stride=1: identity.  stride=2: divisible -> strided-view path.
    # stride=3: ragged (16 % 3 != 0) -> contiguous group-read path (no padding).
    for stride in (1, 2, 3):
        y = jax.block_until_ready(shrink_forward(x, stride))
        ref = _reference(x, stride)
        assert y.shape == ref.shape and y.dtype == ref.dtype
        assert bool(jnp.all(y == ref))

    print("KERNEL_OK")
</pallas_src>

<mosaic_0001>
module attributes {stable_mosaic.version = 11 : i64} {
  func.func @_copy_kernel(%arg0: i32, %arg1: i32, %arg2: memref<8x128xf32, #tpu.memory_space<vmem>>, %arg3: memref<8x128xf32, #tpu.memory_space<vmem>>) attributes {dimension_semantics = [#tpu.dimension_semantics<parallel>, #tpu.dimension_semantics<parallel>], iteration_bounds = array<i64: 2, 1>, scalar_prefetch = 0 : i64, scratch_operands = 0 : i64, tpu.core_type = #tpu.core_type<tc>, window_params = [{transform_indices = @transform_0, window_bounds = array<i64: 8, 128>}, {transform_indices = @transform_1, window_bounds = array<i64: 8, 128>}]} {
    %c0 = arith.constant 0 : index
    %c0_0 = arith.constant 0 : index
    %0 = vector.load %arg2[%c0, %c0_0] : memref<8x128xf32, #tpu.memory_space<vmem>>, vector<8x128xf32>
    %c0_1 = arith.constant 0 : index
    %c0_2 = arith.constant 0 : index
    %1 = vector.load %arg3[%c0_1, %c0_2] : memref<8x128xf32, #tpu.memory_space<vmem>>, vector<8x128xf32>
    tpu.vector_store %arg3[%c0_1, %c0_2], %0 {strides = array<i32>} : memref<8x128xf32, #tpu.memory_space<vmem>>, vector<8x128xf32>,
    return
  }
  func.func @transform_0(%arg0: i32, %arg1: i32) -> (i32, i32) {
    %c0_i32 = arith.constant 0 : i32
    return %arg0, %arg1 : i32, i32
  }
  func.func @transform_1(%arg0: i32, %arg1: i32) -> (i32, i32) {
    %c0_i32 = arith.constant 0 : i32
    return %arg0, %arg1 : i32, i32
  }
}

</mosaic_0001>

<llo_original>
// kernel: tpu_custom_call.1
$region0: #{tpu_custom_call.1}
  #allocation0 [shape = 'u32[]', space=smem, size = 0x4, offset = 0x4, fixed_abs, tag = 'smem constant byte address 0x4 - core index']
  #allocation1 [shape = 'u32[144,128]{1,0:T(1,128)}', space=vmem, size = 0x12000, scoped, tag = 'internal scratch']
  %s0 = inlined_call_operand.hbm [shape: f32[16,256], index: 0, kind: input, shape index: {}]
  %s1 = inlined_call_operand.hbm [shape: f32[16,128], index: 1, kind: output, shape index: {}]
  %s2 = sld [smem:[#allocation0]]
  $region41: #{tpu_custom_call.1} parent=0
    _
  %s4 = ssub.s32 1, %s2
  %s5 = scalar_select 0, %s4, %s2
  $region1: #{tpu_custom_call.1} parent=0
    #allocation2 [shape = 'u8[8192]{0}', space=vmem, size = 0x2000, scoped, tag = 'input window, operand 0']
    #allocation3 [shape = 's32[2]{0}', space=sflag, size = 0x8, scoped, tag = 'scoped memory for tpu_custom_call.1']
    #allocation4 [shape = 's32[2]{0}', space=sflag, size = 0x8, scoped, tag = 'scoped memory for tpu_custom_call.1']
    #allocation5 [shape = 'u8[8192]{0}', space=vmem, size = 0x2000, scoped, tag = 'output window, operand 0']
    %6 = vsyncpa [#allocation3], 0
    %s7 = scalar_lea.sflag [#allocation3], 1
    %8 = vsyncpa %s7, 0
    %9 = vsyncpa [#allocation4], 0
    %s10 = scalar_lea.sflag [#allocation4], 1
    %11 = vsyncpa %s10, 0
    loop: start=0, step=1, limit=4
    $region2: #{tpu_custom_call.1} parent=1 // loop_pre_header
      _
    $region3: #{tpu_custom_call.1} parent=1 // loop_header
      %s13 = sphi 0, %s17
      %p14 = scmp.ge.s32.totalorder %s13, 4
      %s20 = sphi 0, %s32
      %s21 = sphi 0, %s28
      %s22 = sphi 0, %s20
      %s23 = sphi 0, %s21
      %s24 = sphi 0, %s22
      %s25 = sphi 0, %s23
      %s37 = sphi 0, %s39
      %s40 = sphi 0, %s37
      %s41 = sphi 0, %s40
      %s57 = sphi 0, %s41
      %s65 = sphi 0, %s67
      %s68 = sphi 0, %s65
      %s69 = sphi 0, %s68
      %s85 = sphi 0, %s69
    $region4: #{tpu_custom_call.1} parent=1 // loop_header_branch
      %16 = sbr.rel (%p14) target = $region8
    $region5: #{tpu_custom_call.1} parent=1 // loop_body
      %s18 = ssub.s32 %s13, 1
      %s19 = ssub.s32 %s13, 2
      %s26 = sadd.s32 1, %s21
      %p27 = scmp.ge.s32.totalorder %s26, 1
      %s28 = scalar_select %p27, 0, %s26
      %s29 = sadd.s32 1, %s20
      %s30 = scalar_select %p27, %s29, %s20
      %p31 = scmp.ge.s32.totalorder %s30, 2
      %s32 = scalar_select %p31, 0, %s30
      %s33 = ssub.s32 %s20, %s32
      %s34 = ssub.s32 %s21, %s28
      %s35 = sor.u32 %s33, %s34
      %p36 = scmp.eq.s32.totalorder %s35, 0
      %s38 = sadd.s32 %s37, 1
      %s39 = scalar_select %p36, %s37, %s38
      %p42 = pneg %p36
      %p43 = scmp.eq.s32.totalorder %s13, 1
      %p44 = por %p42, %p43
      %p45 = scmp.ne.s32.totalorder %s37, %s40
      %p46 = scmp.eq.s32.totalorder %s13, 0
      %p47 = por %p45, %p46
      %p48 = scmp.ne.s32.totalorder %s37, %s40
      %p49 = scmp.eq.s32.totalorder %s18, 1
      %p50 = por %p48, %p49
      %p51 = scmp.ne.s32.totalorder %s40, %s41
      %p52 = scmp.eq.s32.totalorder %s18, 0
      %p53 = por %p51, %p52
      %p54 = scmp.ne.s32.totalorder %s40, %s41
      %p55 = scmp.eq.s32.totalorder %s19, 1
      %p56 = por %p54, %p55
      %p58 = scmp.ne.s32.totalorder %s41, %s57
      %p59 = scmp.eq.s32.totalorder %s19, 0
      %p60 = por %p58, %p59
      %s61 = ssub.s32 %s20, %s32
      %s62 = ssub.s32 %s21, %s28
      %s63 = sor.u32 %s61, %s62
      %p64 = scmp.eq.s32.totalorder %s63, 0
      %s66 = sadd.s32 %s65, 1
      %s67 = scalar_select %p64, %s65, %s66
      %p70 = pneg %p64
      %p71 = scmp.eq.s32.totalorder %s13, 1
      %p72 = por %p70, %p71
      %p73 = scmp.ne.s32.totalorder %s65, %s68
      %p74 = scmp.eq.s32.totalorder %s13, 0
      %p75 = por %p73, %p74
      %p76 = scmp.ne.s32.totalorder %s65, %s68
      %p77 = scmp.eq.s32.totalorder %s18, 1
      %p78 = por %p76, %p77
      %p79 = scmp.ne.s32.totalorder %s68, %s69
      %p80 = scmp.eq.s32.totalorder %s18, 0
      %p81 = por %p79, %p80
      %p82 = scmp.ne.s32.totalorder %s68, %s69
      %p83 = scmp.eq.s32.totalorder %s19, 1
      %p84 = por %p82, %p83
      %p86 = scmp.ne.s32.totalorder %s69, %s85
      %p87 = scmp.eq.s32.totalorder %s19, 0
      %p88 = por %p86, %p87
      %p89 = scmp.le.s32.totalorder 1, %s13
      %p90 = scmp.lt.s32.totalorder %s13, 3
      %p91 = pnand %p89, %p90
      %p92 = pneg %p91
      // Predicated region
      $region9: #{tpu_custom_call.1} parent=5 // pred_check
        _
      $region10: #{tpu_custom_call.1} parent=5 // pred_check_branch
        %94 = sbr.rel (%p91) target = $region12
      $region11: #{tpu_custom_call.1} parent=5 // pred_region
        %s95 = ssub.s32 %s13, 1
      $region12: #{tpu_custom_call.1} parent=5 // pred_fallthru
        _
      %p96 = scmp.lt.s32.totalorder %s13, 2
      // Predicated region
      $region13: #{tpu_custom_call.1} parent=5 // pred_check
        %p97 = pneg %p96
      $region14: #{tpu_custom_call.1} parent=5 // pred_check_branch
        %99 = sbr.rel (%p97) target = $region16
      $region15: #{tpu_custom_call.1} parent=5 // pred_region
        // Predicated region
        $region17: #{tpu_custom_call.1} parent=15 // pred_check
          %p100 = pneg %p47
        $region18: #{tpu_custom_call.1} parent=15 // pred_check_branch
          %102 = sbr.rel (%p100) target = $region20
        $region19: #{tpu_custom_call.1} parent=15 // pred_region
          %s103 = sand.u32 %s37, 1
          %s104 = scalar_lea.sflag [#allocation3], %s103
          %s105 = sand.u32 %s37, 1
          %s106 = smul.addr %s105, 8
          %s107 = scalar_lea.vmem [#allocation2], %s106
          %s109 = ssub.s32 128, 128
          %110 = vsyncadd %s104, %s109
          %s111 = smul.addr %s20, 2
          %s112 = sadd.s32 %s21, %s111
          %s113 = smul.addr %s112, 128
          %s114 = scalar_lea.hbm %s0, %s113
          %s116 = sshll.u32 %s107, 4
          %s117 = int_to_ptr.vmem [resolvable:$true] %s116
          %119 = dma.hbm_to_vmem [thread:$0]  %s114, 128, %s117, %s104
        $region20: #{tpu_custom_call.1} parent=15 // pred_fallthru
          _
      $region16: #{tpu_custom_call.1} parent=5 // pred_fallthru
        _
      %p120 = scmp.le.s32.totalorder 1, %s13
      %p121 = scmp.lt.s32.totalorder %s13, 3
      %p122 = pnand %p120, %p121
      %p123 = pneg %p122
      // Predicated region
      $region21: #{tpu_custom_call.1} parent=5 // pred_check
        _
      $region22: #{tpu_custom_call.1} parent=5 // pred_check_branch
        %125 = sbr.rel (%p122) target = $region24
      $region23: #{tpu_custom_call.1} parent=5 // pred_region
        %s126 = ssub.s32 %s13, 1
        %s127 = sand.u32 %s40, 1
        %s128 = scalar_lea.sflag [#allocation3], %s127
        %s129 = sand.u32 %s40, 1
        %s130 = smul.addr %s129, 8
        %s131 = scalar_lea.vmem [#allocation2], %s130
        // Predicated region
        $region25: #{tpu_custom_call.1} parent=23 // pred_check
          %p132 = pneg %p53
        $region26: #{tpu_custom_call.1} parent=23 // pred_check_branch
          %134 = sbr.rel (%p132) target = $region28
        $region27: #{tpu_custom_call.1} parent=23 // pred_region
          %135 = dma.done %s128, 128
        $region28: #{tpu_custom_call.1} parent=23 // pred_fallthru
          _
        %s136 = sand.u32 %s40, 1
        %s137 = scalar_lea.sflag [#allocation3], %s136
        %s138 = sand.u32 %s40, 1
        %s139 = smul.addr %s138, 8
        %s140 = scalar_lea.vmem [#allocation2], %s139
        %p141 = pneg %p53
        %p142 = pneg %p50
        %p143 = pneg %p81
        %p144 = pneg %p78
        %s145 = sand.u32 %s68, 1
        %s146 = scalar_lea.sflag [#allocation4], %s145
        %s147 = sand.u32 %s68, 1
        %s148 = smul.addr %s147, 8
        %s149 = scalar_lea.vmem [#allocation5], %s148
        %v150 = vld [vmem:[%s131] sm:$0xff]
        %151 = vst [vmem:[%s149] sm:$0xff] %v150
        %s152 = sand.u32 %s68, 1
        %s153 = scalar_lea.sflag [#allocation4], %s152
        %s154 = sand.u32 %s68, 1
        %s155 = smul.addr %s154, 8
        %s156 = scalar_lea.vmem [#allocation5], %s155
        // Predicated region
        $region29: #{tpu_custom_call.1} parent=23 // pred_check
          %p157 = pneg %p78
        $region30: #{tpu_custom_call.1} parent=23 // pred_check_branch
          %159 = sbr.rel (%p157) target = $region32
        $region31: #{tpu_custom_call.1} parent=23 // pred_region
          %s161 = ssub.s32 128, 128
          %162 = vsyncadd %s153, %s161
          %s163 = sadd.s32 %s23, %s22
          %s164 = smul.addr %s163, 128
          %s165 = scalar_lea.hbm %s1, %s164
          %s167 = sshll.u32 %s156, 4
          %s168 = int_to_ptr.vmem [resolvable:$true] %s167
          %170 = dma.vmem_to_hbm [thread:$0]  %s168, 128, %s165, %s153
        $region32: #{tpu_custom_call.1} parent=23 // pred_fallthru
          _
      $region24: #{tpu_custom_call.1} parent=5 // pred_fallthru
        _
      %p171 = scmp.le.s32.totalorder 2, %s13
      // Predicated region
      $region33: #{tpu_custom_call.1} parent=5 // pred_check
        %p172 = pneg %p171
      $region34: #{tpu_custom_call.1} parent=5 // pred_check_branch
        %174 = sbr.rel (%p172) target = $region36
      $region35: #{tpu_custom_call.1} parent=5 // pred_region
        %s175 = ssub.s32 %s13, 2
        // Predicated region
        $region37: #{tpu_custom_call.1} parent=35 // pred_check
          %p176 = pneg %p84
        $region38: #{tpu_custom_call.1} parent=35 // pred_check_branch
          %178 = sbr.rel (%p176) target = $region40
        $region39: #{tpu_custom_call.1} parent=35 // pred_region
          %s179 = sand.u32 %s69, 1
          %s180 = scalar_lea.sflag [#allocation4], %s179
          %s181 = sand.u32 %s69, 1
          %s182 = smul.addr %s181, 8
          %s183 = scalar_lea.vmem [#allocation5], %s182
          %184 = dma.done %s180, 128
        $region40: #{tpu_custom_call.1} parent=35 // pred_fallthru
          _
      $region36: #{tpu_custom_call.1} parent=5 // pred_fallthru
        _
    $region6: #{tpu_custom_call.1} parent=1 // loop_footer
      %s17 = sadd.s32 1, %s13
    $region7: #{tpu_custom_call.1} parent=1 // loop_footer_branch
      %12 = sbr.rel target = $region3
    $region8: #{tpu_custom_call.1} parent=1 // loop_exit
      _
    %185 = vsyncpa [#allocation3], 1
    %s186 = scalar_lea.sflag [#allocation3], 1
    %187 = vsyncpa %s186, 1
    %188 = vsyncpa [#allocation4], 1
    %s189 = scalar_lea.sflag [#allocation4], 1
    %190 = vsyncpa %s189, 1

</llo_original>
